<compile_context>
chip_gen: v7x
topology: tpu7x:2x2x1
jax: 0.10.0
libtpu: 0.0.40
codegen_flags: <defaults>
</compile_context>

<pallas_src>
import jax
import jax.numpy as jnp
from jax.experimental import pallas as pl
from jax.experimental.pallas import tpu as pltpu


def gnn_kernel(vec_ref, a_ref, pk_ref, w2_ref, out_ref):
    """Processes G graphs per grid step.

    vec_ref: [G, Np, 8]  col0 = x, col1 = 1/max(in_degree,1), col2 = pooling weight
    a_ref  : [G, Np, Np] int8 dense adjacency, A[g, target, source] = multiplicity
    pk_ref : [8, H]      row0=W1^T row, row1=b1, row2=b2s, row3=Wlin row, [4,0]=blin
    w2_ref : [2H, H]     rows 0:H = W2_sum^T, rows H:2H = W2_mean^T
    out_ref: [G, 1]
    """
    neg = jnp.float32(0.01)
    G, Np, _ = a_ref.shape
    H = w2_ref.shape[1]
    GN = G * Np

    # int8 in HBM -> f32 in VMEM, cast once (4x less DMA traffic than f32 A).
    A = a_ref[...].astype(jnp.float32)          # [G, Np, Np]

    vec = vec_ref[...].reshape(GN, 8)           # graphs stacked along the sublane/M axis
    x = vec[:, 0:1]                             # [GN, 1]
    inv_deg = vec[:, 1:2]                       # [GN, 1]
    pw = vec[:, 2:3]                            # [GN, 1]

    w1_row = pk_ref[0:1, :]                     # [1, H]
    b1 = pk_ref[1:2, :]
    b2s = pk_ref[2:3, :]
    wlin_row = pk_ref[3:4, :]
    blin = pk_ref[4:5, 0:1]                     # [1, 1]

    w2s_t = w2_ref[0:H, :]                      # [H, H]
    w2m_t = w2_ref[H:2 * H, :]

    def block_diag_mm(m):
        """Per-graph A_g @ m_g with graphs stacked on M; statically unrolled 2-D MXU dots."""
        return jnp.concatenate(
            [jnp.dot(A[g], m[g * Np:(g + 1) * Np, :],
                     preferred_element_type=jnp.float32) for g in range(G)],
            axis=0)                             # [GN, H]

    # ---- sage1 (sum aggr): (A @ x) @ W1^T == A @ (x * w1_row) ----
    h = block_diag_mm(x * w1_row) + b1          # [GN, H]
    h = jnp.where(h > 0, h, neg * h)            # leaky_relu

    # ---- sage2_sum (sum aggr, bias): weight dot with graphs stacked along M ----
    h = jnp.dot(block_diag_mm(h), w2s_t, preferred_element_type=jnp.float32) + b2s

    # ---- sage2_mean (mean aggr, no bias): mean = inv_deg * (A @ h) ----
    h = jnp.dot(inv_deg * block_diag_mm(h), w2m_t, preferred_element_type=jnp.float32)
    h = jnp.where(h > 0, h, neg * h)            # leaky_relu

    # ---- global_mean_pool: weighted sum over each graph's real nodes ----
    g = jnp.sum((pw * h).reshape(G, Np, H), axis=1)                     # [G, H]

    # ---- lin: H -> 1 as VPU multiply + lane reduce (avoid degenerate N=1 MXU dot) ----
    out_ref[...] = jnp.sum(g * wlin_row, axis=-1, keepdims=True) + blin  # [G, 1]


def _round_up(v, m):
    return -(-v // m) * m


def gnn_forward(x, edge_index, batch, num_graphs, params, graphs_per_step=8):
    """x: [N,1] f32, edge_index: [2,E] int32 (row0=src, row1=dst), batch: [N] int32."""
    N = x.shape[0]
    B = int(num_graphs)
    H = params["w1"].shape[0]

    batch = batch.astype(jnp.int32)
    src = edge_index[0].astype(jnp.int32)
    dst = edge_index[1].astype(jnp.int32)

    # Per-graph node layout (graphs in a PyG batch are disjoint & contiguous, ids 0..B-1).
    counts = jnp.bincount(batch, length=B)                     # [B]
    offsets = jnp.cumsum(counts) - counts                      # [B]
    pos = jnp.arange(N, dtype=jnp.int32) - offsets[batch]      # node index within its graph
    # NOTE: host sync (data-dependent padding); fine for this standalone script.
    n_max = int(jnp.max(counts))
    if n_max >= 64:
        n_pad = _round_up(n_max, 128)          # lane-dense once the O(Np^2) block dominates
    else:
        n_pad = _round_up(max(n_max, 1), 32)   # int8 sublane tile

    # --- choose how many graphs per grid step (amortize step overhead, stay in VMEM) ---
    a_in = n_pad * n_pad * 1 * 2                              # int8 A, double-buffered
    vec_in = n_pad * 8 * 4 * 2                                # packed f32 vectors, double-buffered
    temps = n_pad * n_pad * 4 + 4 * n_pad * H * 4             # f32 A cast + activations
    per_graph = a_in + vec_in + temps
    vmem_budget = 40 * 1024 * 1024                            # headroom on v7x's 64 MiB VMEM
    G = int(max(1, min(graphs_per_step, B, vmem_budget // max(per_graph, 1))))
    num_groups = -(-B // G)
    B_pad = num_groups * G                                    # padded graphs produce blin, dropped below

    # --- dense per-graph blocks; adjacency stored as int8 (multiplicities <= 127) ---
    A_i32 = jnp.zeros((B_pad, n_pad, n_pad), jnp.int32).at[
        batch[dst], pos[dst], pos[src]].add(1)
    A_b = A_i32.astype(jnp.int8)
    deg = A_i32.sum(axis=-1).astype(jnp.float32)              # [B_pad, n_pad]
    inv_deg = 1.0 / jnp.maximum(deg, 1.0)

    # Pack x / inv_deg / pooling weights into one per-graph buffer -> one DMA per step.
    vec = jnp.zeros((B_pad, n_pad, 8), jnp.float32)
    vec = vec.at[batch, pos, 0].set(x[:, 0].astype(jnp.float32))
    vec = vec.at[:, :, 1].set(inv_deg)
    vec = vec.at[batch, pos, 2].set(
        1.0 / jnp.maximum(counts[batch], 1).astype(jnp.float32))

    # Small per-channel params packed into one (8,H) buffer; HxH weights pre-transposed into (2H,H).
    pk = jnp.zeros((8, H), jnp.float32)
    pk = pk.at[0, :].set(params["w1"][:, 0])       # W1^T row
    pk = pk.at[1, :].set(params["b1"])
    pk = pk.at[2, :].set(params["b2s"])
    pk = pk.at[3, :].set(params["wlin"][0, :])     # Wlin row
    pk = pk.at[4, 0].set(params["blin"][0])
    w2 = jnp.concatenate([params["w2s"].T, params["w2m"].T], axis=0)  # [2H, H]

    out = pl.pallas_call(
        gnn_kernel,
        out_shape=jax.ShapeDtypeStruct((num_groups, G, 1), jnp.float32),
        grid=(num_groups,),
        in_specs=[
            pl.BlockSpec((G, n_pad, 8), lambda b: (b, 0, 0)),        # packed x/inv_deg/pool
            pl.BlockSpec((G, n_pad, n_pad), lambda b: (b, 0, 0)),    # int8 adjacency
            pl.BlockSpec((8, H), lambda b: (0, 0)),                  # packed small params
            pl.BlockSpec((2 * H, H), lambda b: (0, 0)),              # packed HxH weights
        ],
        out_specs=pl.BlockSpec((None, G, 1), lambda b: (b, 0, 0)),
        compiler_params=pltpu.CompilerParams(
            dimension_semantics=("parallel",),                       # shards groups across v7x TCs
            vmem_limit_bytes=48 * 1024 * 1024),
    )(vec, A_b, pk, w2)
    return out.reshape(B_pad, 1)[:B]


def reference_forward(x, edge_index, batch, num_graphs, params):
    """Pure-JAX reference mirroring the PyTorch model semantics (global dense A)."""
    N = x.shape[0]
    src, dst = edge_index[0], edge_index[1]
    A = jnp.zeros((N, N), jnp.float32).at[dst, src].add(1.0)
    deg = A.sum(axis=1, keepdims=True)
    Am = A / jnp.maximum(deg, 1.0)
    P = jnp.zeros((num_graphs, N), jnp.float32).at[batch, jnp.arange(N)].set(1.0)
    P = P / jnp.maximum(P.sum(axis=1, keepdims=True), 1.0)

    def lrelu(v):
        return jnp.where(v > 0, v, 0.01 * v)

    h = (A @ x) @ params["w1"].T + params["b1"]
    h = lrelu(h)
    h = (A @ h) @ params["w2s"].T + params["b2s"]
    h = (Am @ h) @ params["w2m"].T
    h = lrelu(h)
    g = P @ h
    return g @ params["wlin"].T + params["blin"]


def init_params(key, hidden):
    ks = jax.random.split(key, 7)
    scale = 0.1
    return {
        "w1":   scale * jax.random.normal(ks[0], (hidden, 1), jnp.float32),
        "b1":   scale * jax.random.normal(ks[1], (hidden,), jnp.float32),
        "w2s":  scale * jax.random.normal(ks[2], (hidden, hidden), jnp.float32),
        "b2s":  scale * jax.random.normal(ks[3], (hidden,), jnp.float32),
        "w2m":  scale * jax.random.normal(ks[4], (hidden, hidden), jnp.float32),
        "wlin": scale * jax.random.normal(ks[5], (1, hidden), jnp.float32),
        "blin": scale * jax.random.normal(ks[6], (1,), jnp.float32),
    }


if __name__ == "__main__":
    key = jax.random.PRNGKey(0)
    N, E, B, H = 8, 12, 2, 32

    k_x, k_e, k_p = jax.random.split(key, 3)
    x = jax.random.normal(k_x, (N, 1), jnp.float32)
    # Random directed edges (src row 0, dst row 1), kept within each graph's node range.
    src = jax.random.randint(k_e, (E,), 0, N // 2)
    dst = (src + 1 + jax.random.randint(jax.random.fold_in(k_e, 1), (E,), 0, N // 2 - 1)) % (N // 2)
    shift = jnp.where(jnp.arange(E) < E // 2, 0, N // 2)   # half in graph 0, half in graph 1
    edge_index = jnp.stack([src + shift, dst + shift]).astype(jnp.int32)
    batch = (jnp.arange(N) >= N // 2).astype(jnp.int32)    # graph 0: nodes 0..3, graph 1: nodes 4..7

    params = init_params(k_p, H)

    out = gnn_forward(x, edge_index, batch, B, params)
    out = jax.block_until_ready(out)

    ref = reference_forward(x, edge_index, batch, B, params)
    assert out.shape == (B, 1)
    assert jnp.allclose(out, ref, atol=1e-5, rtol=1e-5), (out, ref)

    print("KERNEL_OK")
</pallas_src>

<mosaic_0001>
module attributes {stable_mosaic.version = 11 : i64} {
  func.func @gnn_kernel(%arg0: i32, %arg1: memref<2x32x8xf32, #tpu.memory_space<vmem>>, %arg2: memref<2x32x32xi8, #tpu.memory_space<vmem>>, %arg3: memref<8x32xf32, #tpu.memory_space<vmem>>, %arg4: memref<64x32xf32, #tpu.memory_space<vmem>>, %arg5: memref<1x2x1xf32, #tpu.memory_space<vmem>>) attributes {dimension_semantics = [#tpu.dimension_semantics<parallel>], iteration_bounds = array<i64: 1>, scalar_prefetch = 0 : i64, scratch_operands = 0 : i64, tpu.core_type = #tpu.core_type<tc>, window_params = [{transform_indices = @transform_0, window_bounds = array<i64: 2, 32, 8>}, {transform_indices = @transform_1, window_bounds = array<i64: 2, 32, 32>}, {pipeline_mode = #tpu.pipeline_mode<synchronous>, transform_indices = @transform_2, window_bounds = array<i64: 8, 32>}, {pipeline_mode = #tpu.pipeline_mode<synchronous>, transform_indices = @transform_3, window_bounds = array<i64: 64, 32>}, {transform_indices = @transform_4, window_bounds = array<i64: 1, 2, 1>}]} {
    %c0 = arith.constant 0 : index
    %c0_0 = arith.constant 0 : index
    %c0_1 = arith.constant 0 : index
    %0 = vector.load %arg2[%c0, %c0_0, %c0_1] : memref<2x32x32xi8, #tpu.memory_space<vmem>>, vector<2x32x32xi8>
    %1 = arith.sitofp %0 : vector<2x32x32xi8> to vector<2x32x32xf32>
    %c0_2 = arith.constant 0 : index
    %c0_3 = arith.constant 0 : index
    %c0_4 = arith.constant 0 : index
    %2 = vector.load %arg1[%c0_2, %c0_3, %c0_4] : memref<2x32x8xf32, #tpu.memory_space<vmem>>, vector<2x32x8xf32>
    %3 = vector.shape_cast %2 : vector<2x32x8xf32> to vector<64x8xf32>
    %4 = vector.extract_strided_slice %3 {offsets = [0, 0], sizes = [64, 1], strides = [1, 1]} : vector<64x8xf32> to vector<64x1xf32>
    %5 = vector.extract_strided_slice %3 {offsets = [0, 1], sizes = [64, 1], strides = [1, 1]} : vector<64x8xf32> to vector<64x1xf32>
    %6 = vector.extract_strided_slice %3 {offsets = [0, 2], sizes = [64, 1], strides = [1, 1]} : vector<64x8xf32> to vector<64x1xf32>
    %c0_5 = arith.constant 0 : index
    %c0_6 = arith.constant 0 : index
    %7 = vector.load %arg3[%c0_5, %c0_6] : memref<8x32xf32, #tpu.memory_space<vmem>>, vector<1x32xf32>
    %c1 = arith.constant 1 : index
    %c0_7 = arith.constant 0 : index
    %8 = vector.load %arg3[%c1, %c0_7] : memref<8x32xf32, #tpu.memory_space<vmem>>, vector<1x32xf32>
    %c2 = arith.constant 2 : index
    %c0_8 = arith.constant 0 : index
    %9 = vector.load %arg3[%c2, %c0_8] : memref<8x32xf32, #tpu.memory_space<vmem>>, vector<1x32xf32>
    %c3 = arith.constant 3 : index
    %c0_9 = arith.constant 0 : index
    %10 = vector.load %arg3[%c3, %c0_9] : memref<8x32xf32, #tpu.memory_space<vmem>>, vector<1x32xf32>
    %c4 = arith.constant 4 : index
    %c0_10 = arith.constant 0 : index
    %11 = vector.load %arg3[%c4, %c0_10] : memref<8x32xf32, #tpu.memory_space<vmem>>, vector<1x1xf32>
    %c0_11 = arith.constant 0 : index
    %c0_12 = arith.constant 0 : index
    %12 = vector.load %arg4[%c0_11, %c0_12] : memref<64x32xf32, #tpu.memory_space<vmem>>, vector<32x32xf32>
    %c32 = arith.constant 32 : index
    %c0_13 = arith.constant 0 : index
    %13 = vector.load %arg4[%c32, %c0_13] : memref<64x32xf32, #tpu.memory_space<vmem>>, vector<32x32xf32>
    %14 = vector.broadcast %4 : vector<64x1xf32> to vector<64x32xf32>
    %15 = vector.broadcast %7 : vector<1x32xf32> to vector<64x32xf32>
    %16 = arith.mulf %14, %15 : vector<64x32xf32>
    %17 = vector.extract_strided_slice %1 {offsets = [0, 0, 0], sizes = [1, 32, 32], strides = [1, 1, 1]} : vector<2x32x32xf32> to vector<1x32x32xf32>
    %18 = vector.shape_cast %17 : vector<1x32x32xf32> to vector<32x32xf32>
    %19 = vector.extract_strided_slice %16 {offsets = [0, 0], sizes = [32, 32], strides = [1, 1]} : vector<64x32xf32> to vector<32x32xf32>
    %cst = arith.constant dense<0.000000e+00> : vector<32x32xf32>
    %20 = tpu.matmul %18, %19, %cst {dimension_numbers = #tpu.dot_dimension_numbers<[1], [0], [0], [1], [0, 0, 1, 1], [], []>} : vector<32x32xf32>, vector<32x32xf32>, vector<32x32xf32> -> vector<32x32xf32>
    %21 = vector.extract_strided_slice %1 {offsets = [1, 0, 0], sizes = [1, 32, 32], strides = [1, 1, 1]} : vector<2x32x32xf32> to vector<1x32x32xf32>
    %22 = vector.shape_cast %21 : vector<1x32x32xf32> to vector<32x32xf32>
    %23 = vector.extract_strided_slice %16 {offsets = [32, 0], sizes = [32, 32], strides = [1, 1]} : vector<64x32xf32> to vector<32x32xf32>
    %cst_14 = arith.constant dense<0.000000e+00> : vector<32x32xf32>
    %24 = tpu.matmul %22, %23, %cst_14 {dimension_numbers = #tpu.dot_dimension_numbers<[1], [0], [0], [1], [0, 0, 1, 1], [], []>} : vector<32x32xf32>, vector<32x32xf32>, vector<32x32xf32> -> vector<32x32xf32>
    %25 = tpu.concatenate %20, %24 in 0 : vector<32x32xf32>, vector<32x32xf32> -> vector<64x32xf32>
    %26 = vector.broadcast %8 : vector<1x32xf32> to vector<64x32xf32>
    %27 = arith.addf %25, %26 : vector<64x32xf32>
    %cst_15 = arith.constant 0.000000e+00 : f32
    %28 = vector.broadcast %cst_15 : f32 to vector<64x32xf32>
    %29 = arith.cmpf ogt, %27, %28 : vector<64x32xf32>
    %cst_16 = arith.constant 0.00999999977 : f32
    %30 = vector.broadcast %cst_16 : f32 to vector<64x32xf32>
    %31 = arith.mulf %30, %27 : vector<64x32xf32>
    %32 = arith.select %29, %27, %31 : vector<64x32xi1>, vector<64x32xf32>
    %33 = vector.extract_strided_slice %1 {offsets = [0, 0, 0], sizes = [1, 32, 32], strides = [1, 1, 1]} : vector<2x32x32xf32> to vector<1x32x32xf32>
    %34 = vector.shape_cast %33 : vector<1x32x32xf32> to vector<32x32xf32>
    %35 = vector.extract_strided_slice %32 {offsets = [0, 0], sizes = [32, 32], strides = [1, 1]} : vector<64x32xf32> to vector<32x32xf32>
    %cst_17 = arith.constant dense<0.000000e+00> : vector<32x32xf32>
    %36 = tpu.matmul %34, %35, %cst_17 {dimension_numbers = #tpu.dot_dimension_numbers<[1], [0], [0], [1], [0, 0, 1, 1], [], []>} : vector<32x32xf32>, vector<32x32xf32>, vector<32x32xf32> -> vector<32x32xf32>
    %37 = vector.extract_strided_slice %1 {offsets = [1, 0, 0], sizes = [1, 32, 32], strides = [1, 1, 1]} : vector<2x32x32xf32> to vector<1x32x32xf32>
    %38 = vector.shape_cast %37 : vector<1x32x32xf32> to vector<32x32xf32>
    %39 = vector.extract_strided_slice %32 {offsets = [32, 0], sizes = [32, 32], strides = [1, 1]} : vector<64x32xf32> to vector<32x32xf32>
    %cst_18 = arith.constant dense<0.000000e+00> : vector<32x32xf32>
    %40 = tpu.matmul %38, %39, %cst_18 {dimension_numbers = #tpu.dot_dimension_numbers<[1], [0], [0], [1], [0, 0, 1, 1], [], []>} : vector<32x32xf32>, vector<32x32xf32>, vector<32x32xf32> -> vector<32x32xf32>
    %41 = tpu.concatenate %36, %40 in 0 : vector<32x32xf32>, vector<32x32xf32> -> vector<64x32xf32>
    %cst_19 = arith.constant dense<0.000000e+00> : vector<64x32xf32>
    %42 = tpu.matmul %41, %12, %cst_19 {dimension_numbers = #tpu.dot_dimension_numbers<[1], [0], [0], [1], [0, 0, 1, 1], [], []>} : vector<64x32xf32>, vector<32x32xf32>, vector<64x32xf32> -> vector<64x32xf32>
    %43 = vector.broadcast %9 : vector<1x32xf32> to vector<64x32xf32>
    %44 = arith.addf %42, %43 : vector<64x32xf32>
    %45 = vector.extract_strided_slice %1 {offsets = [0, 0, 0], sizes = [1, 32, 32], strides = [1, 1, 1]} : vector<2x32x32xf32> to vector<1x32x32xf32>
    %46 = vector.shape_cast %45 : vector<1x32x32xf32> to vector<32x32xf32>
    %47 = vector.extract_strided_slice %44 {offsets = [0, 0], sizes = [32, 32], strides = [1, 1]} : vector<64x32xf32> to vector<32x32xf32>
    %cst_20 = arith.constant dense<0.000000e+00> : vector<32x32xf32>
    %48 = tpu.matmul %46, %47, %cst_20 {dimension_numbers = #tpu.dot_dimension_numbers<[1], [0], [0], [1], [0, 0, 1, 1], [], []>} : vector<32x32xf32>, vector<32x32xf32>, vector<32x32xf32> -> vector<32x32xf32>
    %49 = vector.extract_strided_slice %1 {offsets = [1, 0, 0], sizes = [1, 32, 32], strides = [1, 1, 1]} : vector<2x32x32xf32> to vector<1x32x32xf32>
    %50 = vector.shape_cast %49 : vector<1x32x32xf32> to vector<32x32xf32>
    %51 = vector.extract_strided_slice %44 {offsets = [32, 0], sizes = [32, 32], strides = [1, 1]} : vector<64x32xf32> to vector<32x32xf32>
    %cst_21 = arith.constant dense<0.000000e+00> : vector<32x32xf32>
    %52 = tpu.matmul %50, %51, %cst_21 {dimension_numbers = #tpu.dot_dimension_numbers<[1], [0], [0], [1], [0, 0, 1, 1], [], []>} : vector<32x32xf32>, vector<32x32xf32>, vector<32x32xf32> -> vector<32x32xf32>
    %53 = tpu.concatenate %48, %52 in 0 : vector<32x32xf32>, vector<32x32xf32> -> vector<64x32xf32>
    %54 = vector.broadcast %5 : vector<64x1xf32> to vector<64x32xf32>
    %55 = arith.mulf %54, %53 : vector<64x32xf32>
    %cst_22 = arith.constant dense<0.000000e+00> : vector<64x32xf32>
    %56 = tpu.matmul %55, %13, %cst_22 {dimension_numbers = #tpu.dot_dimension_numbers<[1], [0], [0], [1], [0, 0, 1, 1], [], []>} : vector<64x32xf32>, vector<32x32xf32>, vector<64x32xf32> -> vector<64x32xf32>
    %cst_23 = arith.constant 0.000000e+00 : f32
    %57 = vector.broadcast %cst_23 : f32 to vector<64x32xf32>
    %58 = arith.cmpf ogt, %56, %57 : vector<64x32xf32>
    %cst_24 = arith.constant 0.00999999977 : f32
    %59 = vector.broadcast %cst_24 : f32 to vector<64x32xf32>
    %60 = arith.mulf %59, %56 : vector<64x32xf32>
    %61 = arith.select %58, %56, %60 : vector<64x32xi1>, vector<64x32xf32>
    %62 = vector.broadcast %6 : vector<64x1xf32> to vector<64x32xf32>
    %63 = arith.mulf %62, %61 : vector<64x32xf32>
    %64 = vector.shape_cast %63 : vector<64x32xf32> to vector<2x32x32xf32>
    %cst_25 = arith.constant dense<0.000000e+00> : vector<2x32xf32>
    %65 = vector.multi_reduction <add>, %64, %cst_25 [1] : vector<2x32x32xf32> to vector<2x32xf32>
    %66 = vector.broadcast %10 : vector<1x32xf32> to vector<2x32xf32>
    %67 = arith.mulf %65, %66 : vector<2x32xf32>
    %cst_26 = arith.constant dense<0.000000e+00> : vector<2xf32>
    %68 = vector.multi_reduction <add>, %67, %cst_26 [1] : vector<2x32xf32> to vector<2xf32>
    %69 = vector.shape_cast %68 : vector<2xf32> to vector<2x1xf32>
    %70 = vector.broadcast %11 : vector<1x1xf32> to vector<2x1xf32>
    %71 = arith.addf %69, %70 : vector<2x1xf32>
    %c0_27 = arith.constant 0 : index
    %c0_28 = arith.constant 0 : index
    %c0_29 = arith.constant 0 : index
    %72 = vector.load %arg5[%c0_27, %c0_28, %c0_29] : memref<1x2x1xf32, #tpu.memory_space<vmem>>, vector<1x2x1xf32>
    %73 = vector.shape_cast %72 : vector<1x2x1xf32> to vector<2x1xf32>
    %74 = vector.shape_cast %71 : vector<2x1xf32> to vector<1x2x1xf32>
    tpu.vector_store %arg5[%c0_27, %c0_28, %c0_29], %74 {strides = array<i32>} : memref<1x2x1xf32, #tpu.memory_space<vmem>>, vector<1x2x1xf32>,
    return
  }
  func.func @transform_0(%arg0: i32) -> (i32, i32, i32) {
    %c0_i32 = arith.constant 0 : i32
    %c0_i32_0 = arith.constant 0 : i32
    %c0_i32_1 = arith.constant 0 : i32
    return %arg0, %c0_i32, %c0_i32_0 : i32, i32, i32
  }
  func.func @transform_1(%arg0: i32) -> (i32, i32, i32) {
    %c0_i32 = arith.constant 0 : i32
    %c0_i32_0 = arith.constant 0 : i32
    %c0_i32_1 = arith.constant 0 : i32
    return %arg0, %c0_i32, %c0_i32_0 : i32, i32, i32
  }
  func.func @transform_2(%arg0: i32) -> (i32, i32) {
    %c0_i32 = arith.constant 0 : i32
    %c0_i32_0 = arith.constant 0 : i32
    %c0_i32_1 = arith.constant 0 : i32
    return %c0_i32, %c0_i32_0 : i32, i32
  }
  func.func @transform_3(%arg0: i32) -> (i32, i32) {
    %c0_i32 = arith.constant 0 : i32
    %c0_i32_0 = arith.constant 0 : i32
    %c0_i32_1 = arith.constant 0 : i32
    return %c0_i32, %c0_i32_0 : i32, i32
  }
  func.func @transform_4(%arg0: i32) -> (i32, i32, i32) {
    %c0_i32 = arith.constant 0 : i32
    %c0_i32_0 = arith.constant 0 : i32
    %c0_i32_1 = arith.constant 0 : i32
    return %arg0, %c0_i32, %c0_i32_0 : i32, i32, i32
  }
}

</mosaic_0001>

<llo_original>
// kernel: tpu_custom_call.1
$region0: #{tpu_custom_call.1}
  #allocation0 [shape = 'u32[]', space=smem, size = 0x4, offset = 0x4, fixed_abs, tag = 'smem constant byte address 0x4 - core index']
  #allocation1 [shape = 'u32[144,128]{1,0:T(1,128)}', space=vmem, size = 0x12000, scoped, tag = 'internal scratch']
  %s0 = inlined_call_operand.vmem [shape: f32[2,32,8], index: 0, kind: input, shape index: {}]
  %s1 = inlined_call_operand.vmem [shape: s8[2,32,32], index: 1, kind: input, shape index: {}]
  %s2 = inlined_call_operand.vmem [shape: f32[8,32], index: 2, kind: input, shape index: {}]
  %s3 = inlined_call_operand.vmem [shape: f32[64,32], index: 3, kind: input, shape index: {}]
  %s4 = inlined_call_operand.vmem [shape: f32[1,2,1], index: 4, kind: output, shape index: {}]
  %s5 = sld [smem:[#allocation0]]
  $region26: #{tpu_custom_call.1} parent=0
    _
  %s7 = ssub.s32 1, %s5
  %s8 = scalar_select 0, %s7, %s5
  // Predicated region
  $region2: #{tpu_custom_call.1} parent=0 // pred_check
    _
  $region3: #{tpu_custom_call.1} parent=0 // pred_check_branch
    %10 = sbr.rel (0) target = $region5
  $region4: #{tpu_custom_call.1} parent=0 // pred_region
    _
  $region5: #{tpu_custom_call.1} parent=0 // pred_fallthru
    _
  // Predicated region
  $region6: #{tpu_custom_call.1} parent=0 // pred_check
    _
  $region7: #{tpu_custom_call.1} parent=0 // pred_check_branch
    %12 = sbr.rel (0) target = $region9
  $region8: #{tpu_custom_call.1} parent=0 // pred_region
    _
  $region9: #{tpu_custom_call.1} parent=0 // pred_fallthru
    _
  // Predicated region
  $region10: #{tpu_custom_call.1} parent=0 // pred_check
    _
  $region11: #{tpu_custom_call.1} parent=0 // pred_check_branch
    %14 = sbr.rel (0) target = $region13
  $region12: #{tpu_custom_call.1} parent=0 // pred_region
    _
  $region13: #{tpu_custom_call.1} parent=0 // pred_fallthru
    _
  // Predicated region
  $region14: #{tpu_custom_call.1} parent=0 // pred_check
    _
  $region15: #{tpu_custom_call.1} parent=0 // pred_check_branch
    %16 = sbr.rel (0) target = $region17
  $region16: #{tpu_custom_call.1} parent=0 // pred_region
    _
  $region17: #{tpu_custom_call.1} parent=0 // pred_fallthru
    _
  %v17 = vld [vmem:[%s1] sm:$0xff]
  %v18 = vld [vmem:[%s1 + $0x8] sm:$0xff]
  %v19 = vunpack.c.0.s8 %v17
  %v20 = vunpack.c.1.s8 %v17
  %v21 = vunpack.c.2.s8 %v17
  %v22 = vunpack.c.3.s8 %v17
  %v23 = vunpack.c.0.s8 %v18
  %v24 = vunpack.c.1.s8 %v18
  %v25 = vunpack.c.2.s8 %v18
  %v26 = vunpack.c.3.s8 %v18
  %v27 = vcvt.s32.f32 %v19
  %v28 = vcvt.s32.f32 %v20
  %v29 = vcvt.s32.f32 %v21
  %v30 = vcvt.s32.f32 %v22
  %v31 = vcvt.s32.f32 %v23
  %v32 = vcvt.s32.f32 %v24
  %v33 = vcvt.s32.f32 %v25
  %v34 = vcvt.s32.f32 %v26
  %v35 = vld [vmem:[%s0] sm:$0xff]
  %v36 = vld [vmem:[%s0 + $0x8] sm:$0xff]
  %v37 = vld [vmem:[%s0 + $0x10] sm:$0xff]
  %v38 = vld [vmem:[%s0 + $0x18] sm:$0xff]
  %v39 = vld [vmem:[%s0 + $0x20] sm:$0xff]
  %v40 = vld [vmem:[%s0 + $0x28] sm:$0xff]
  %v41 = vld [vmem:[%s0 + $0x30] sm:$0xff]
  %v42 = vld [vmem:[%s0 + $0x38] sm:$0xff]
  %v43 = vld [vmem:[%s2] sm:$0x1]
  %v44 = vld [vmem:[%s2 + $0x1] sm:$0x1]
  %v45 = vld [vmem:[%s2 + $0x2] sm:$0x1]
  %v46 = vld [vmem:[%s2 + $0x3] sm:$0x1]
  %v47 = vld [vmem:[%s2 + $0x4] sm:$0x1]
  %v48 = vld [vmem:[%s3] sm:$0xff]
  %v49 = vld [vmem:[%s3 + $0x8] sm:$0xff]
  %v50 = vld [vmem:[%s3 + $0x10] sm:$0xff]
  %v51 = vld [vmem:[%s3 + $0x18] sm:$0xff]
  %v52 = vld [vmem:[%s3 + $0x20] sm:$0xff]
  %v53 = vld [vmem:[%s3 + $0x28] sm:$0xff]
  %v54 = vld [vmem:[%s3 + $0x30] sm:$0xff]
  %v55 = vld [vmem:[%s3 + $0x38] sm:$0xff]
  %57 = vset.pattern.permute.xlu0 0
  %58 = vperm.xlu0 %57, %v35
  %v59 = vpop.permute.xlu0 %58
  %62 = vset.pattern.permute.xlu0 0
  %63 = vperm.xlu0 %62, %v36
  %v64 = vpop.permute.xlu0 %63
  %67 = vset.pattern.permute.xlu0 0
  %68 = vperm.xlu0 %67, %v37
  %v69 = vpop.permute.xlu0 %68
  %72 = vset.pattern.permute.xlu0 0
  %73 = vperm.xlu0 %72, %v38
  %v74 = vpop.permute.xlu0 %73
  %77 = vset.pattern.permute.xlu0 0
  %78 = vperm.xlu0 %77, %v39
  %v79 = vpop.permute.xlu0 %78
  %82 = vset.pattern.permute.xlu0 0
  %83 = vperm.xlu0 %82, %v40
  %v84 = vpop.permute.xlu0 %83
  %87 = vset.pattern.permute.xlu0 0
  %88 = vperm.xlu0 %87, %v41
  %v89 = vpop.permute.xlu0 %88
  %92 = vset.pattern.permute.xlu0 0
  %93 = vperm.xlu0 %92, %v42
  %v94 = vpop.permute.xlu0 %93
  %v96 = vlaneseq
  %v97 = vshrl.u32 %v96, 7
  %v98 = vsub.s32 0, %v97
  %v99 = vrot.slane %v43, %v98
  %v100 = vmul.f32 %v59, %v99
  %v101 = vmul.f32 %v64, %v99
  %v102 = vmul.f32 %v69, %v99
  %v103 = vmul.f32 %v74, %v99
  %v104 = vmul.f32 %v79, %v99
  %v105 = vmul.f32 %v84, %v99
  %v106 = vmul.f32 %v89, %v99
  %v107 = vmul.f32 %v94, %v99
  %vm108 = vcmask 261120
  %v110 = vsel %vm108, %v27, 0
  %v113 = vsel %vm108, %v28, 0
  %v116 = vsel %vm108, %v29, 0
  %v119 = vsel %vm108, %v30, 0
  %121 = vmatprep.subr.mxu0 0.0
  %122 = vmatpush1.msra.mxu0 %v100
  %123 = vmatprep.subr.mxu0 0.0
  %124 = vmatpush1.msra.mxu0 %v101
  %125 = vmatprep.subr.mxu0 0.0
  %126 = vmatpush1.msra.mxu0 %v102
  %127 = vmatprep.subr.mxu0 0.0
  %128 = vmatpush1.msra.mxu0 %v103
  %129 = vmatprep.subr.mxu0 0.0
  %130 = vmatpush1.msra.mxu0 0.0
  %131 = vmatprep.subr.mxu0 0.0
  %132 = vmatpush1.msra.mxu0 0.0
  %133 = vmatprep.subr.mxu0 0.0
  %134 = vmatpush1.msra.mxu0 0.0
  %135 = vmatprep.subr.mxu0 0.0
  %136 = vmatpush1.msra.mxu0 0.0
  %137 = vmatprep.subr.mxu0 0.0
  %138 = vmatpush1.msra.mxu0 0.0
  %139 = vmatprep.subr.mxu0 0.0
  %140 = vmatpush1.msra.mxu0 0.0
  %141 = vmatprep.subr.mxu0 0.0
  %142 = vmatpush1.msra.mxu0 0.0
  %143 = vmatprep.subr.mxu0 0.0
  %144 = vmatpush1.msra.mxu0 0.0
  %145 = vmatprep.subr.mxu0 0.0
  %146 = vmatpush1.msra.mxu0 0.0
  %147 = vmatprep.subr.mxu0 0.0
  %148 = vmatpush1.msra.mxu0 0.0
  %149 = vmatprep.subr.mxu0 0.0
  %150 = vmatpush1.msra.mxu0 0.0
  %151 = vmatprep.subr.mxu0 0.0
  %152 = vmatpush1.msra.mxu0 0.0
  %153 = vmatprep.subr.mxu0 0.0
  %154 = vmatpush1.msra.mxu0 0.0
  %155 = vmatprep.subr.mxu0 0.0
  %156 = vmatpush1.msra.mxu0 0.0
  %157 = vmatprep.subr.mxu0 0.0
  %158 = vmatpush1.msra.mxu0 0.0
  %159 = vmatprep.subr.mxu0 0.0
  %160 = vmatpush1.msra.mxu0 0.0
  %161 = vmatprep.subr.mxu0 0.0
  %162 = vmatpush1.msra.mxu0 0.0
  %163 = vmatprep.subr.mxu0 0.0
  %164 = vmatpush1.msra.mxu0 0.0
  %165 = vmatprep.subr.mxu0 0.0
  %166 = vmatpush1.msra.mxu0 0.0
  %167 = vmatprep.subr.mxu0 0.0
  %168 = vmatpush1.msra.mxu0 0.0
  %169 = vmatprep.subr.mxu0 0.0
  %170 = vmatpush1.msra.mxu0 0.0
  %171 = vmatprep.subr.mxu0 0.0
  %172 = vmatpush1.msra.mxu0 0.0
  %173 = vmatprep.subr.mxu0 0.0
  %174 = vmatpush1.msra.mxu0 0.0
  %175 = vmatprep.subr.mxu0 0.0
  %176 = vmatpush1.msra.mxu0 0.0
  %177 = vmatprep.subr.mxu0 0.0
  %178 = vmatpush1.msra.mxu0 0.0
  %179 = vmatprep.subr.mxu0 0.0
  %180 = vmatpush1.msra.mxu0 0.0
  %181 = vmatprep.subr.mxu0 0.0
  %182 = vmatpush1.msra.mxu0 0.0
  %183 = vmatprep.subr.mxu0 0.0
  %184 = vmatpush1.msra.mxu0 0.0
  %185 = vmatprep.mubr.f32.mxu0 0.0
  %186 = vmatmul.mubr.f32.gmra.mrb[0].mxu0 %v110
  %v187 = vpop.f32.mrb[0].mxu0
  %v188 = vadd.f32 0.0, %v187
  %v189 = vpop.f32.mrb[0].mxu0
  %190 = vmatprep.mubr.f32.mxu0 0.0
  %191 = vmatmul.mubr.f32.gmra.mrb[0].mxu0 %v113
  %v192 = vpop.f32.mrb[0].mxu0
  %v193 = vadd.f32 0.0, %v192
  %v194 = vpop.f32.mrb[0].mxu0
  %195 = vmatprep.mubr.f32.mxu0 0.0
  %196 = vmatmul.mubr.f32.gmra.mrb[0].mxu0 %v116
  %v197 = vpop.f32.mrb[0].mxu0
  %v198 = vadd.f32 0.0, %v197
  %v199 = vpop.f32.mrb[0].mxu0
  %200 = vmatprep.mubr.f32.mxu0 0.0
  %201 = vmatmul.mubr.f32.gmra.mrb[0].mxu0 %v119
  %v202 = vpop.f32.mrb[0].mxu0
  %v203 = vadd.f32 0.0, %v202
  %v204 = vpop.f32.mrb[0].mxu0
  %205 = vdwg.mxu0
  %v207 = vsel %vm108, %v31, 0
  %v210 = vsel %vm108, %v32, 0
  %v213 = vsel %vm108, %v33, 0
  %v216 = vsel %vm108, %v34, 0
  %218 = vmatprep.subr.mxu0 0.0
  %219 = vmatpush1.msra.mxu0 %v104
  %220 = vmatprep.subr.mxu0 0.0
  %221 = vmatpush1.msra.mxu0 %v105
  %222 = vmatprep.subr.mxu0 0.0
  %223 = vmatpush1.msra.mxu0 %v106
  %224 = vmatprep.subr.mxu0 0.0
  %225 = vmatpush1.msra.mxu0 %v107
  %226 = vmatprep.subr.mxu0 0.0
  %227 = vmatpush1.msra.mxu0 0.0
  %228 = vmatprep.subr.mxu0 0.0
  %229 = vmatpush1.msra.mxu0 0.0
  %230 = vmatprep.subr.mxu0 0.0
  %231 = vmatpush1.msra.mxu0 0.0
  %232 = vmatprep.subr.mxu0 0.0
  %233 = vmatpush1.msra.mxu0 0.0
  %234 = vmatprep.subr.mxu0 0.0
  %235 = vmatpush1.msra.mxu0 0.0
  %236 = vmatprep.subr.mxu0 0.0
  %237 = vmatpush1.msra.mxu0 0.0
  %238 = vmatprep.subr.mxu0 0.0
  %239 = vmatpush1.msra.mxu0 0.0
  %240 = vmatprep.subr.mxu0 0.0
  %241 = vmatpush1.msra.mxu0 0.0
  %242 = vmatprep.subr.mxu0 0.0
  %243 = vmatpush1.msra.mxu0 0.0
  %244 = vmatprep.subr.mxu0 0.0
  %245 = vmatpush1.msra.mxu0 0.0
  %246 = vmatprep.subr.mxu0 0.0
  %247 = vmatpush1.msra.mxu0 0.0
  %248 = vmatprep.subr.mxu0 0.0
  %249 = vmatpush1.msra.mxu0 0.0
  %250 = vmatprep.subr.mxu0 0.0
  %251 = vmatpush1.msra.mxu0 0.0
  %252 = vmatprep.subr.mxu0 0.0
  %253 = vmatpush1.msra.mxu0 0.0
  %254 = vmatprep.subr.mxu0 0.0
  %255 = vmatpush1.msra.mxu0 0.0
  %256 = vmatprep.subr.mxu0 0.0
  %257 = vmatpush1.msra.mxu0 0.0
  %258 = vmatprep.subr.mxu0 0.0
  %259 = vmatpush1.msra.mxu0 0.0
  %260 = vmatprep.subr.mxu0 0.0
  %261 = vmatpush1.msra.mxu0 0.0
  %262 = vmatprep.subr.mxu0 0.0
  %263 = vmatpush1.msra.mxu0 0.0
  %264 = vmatprep.subr.mxu0 0.0
  %265 = vmatpush1.msra.mxu0 0.0
  %266 = vmatprep.subr.mxu0 0.0
  %267 = vmatpush1.msra.mxu0 0.0
  %268 = vmatprep.subr.mxu0 0.0
  %269 = vmatpush1.msra.mxu0 0.0
  %270 = vmatprep.subr.mxu0 0.0
  %271 = vmatpush1.msra.mxu0 0.0
  %272 = vmatprep.subr.mxu0 0.0
  %273 = vmatpush1.msra.mxu0 0.0
  %274 = vmatprep.subr.mxu0 0.0
  %275 = vmatpush1.msra.mxu0 0.0
  %276 = vmatprep.subr.mxu0 0.0
  %277 = vmatpush1.msra.mxu0 0.0
  %278 = vmatprep.subr.mxu0 0.0
  %279 = vmatpush1.msra.mxu0 0.0
  %280 = vmatprep.subr.mxu0 0.0
  %281 = vmatpush1.msra.mxu0 0.0
  %282 = vmatprep.mubr.f32.mxu0 0.0
  %283 = vmatmul.mubr.f32.gmra.mrb[0].mxu0 %v207
  %v284 = vpop.f32.mrb[0].mxu0
  %v285 = vadd.f32 0.0, %v284
  %v286 = vpop.f32.mrb[0].mxu0
  %287 = vmatprep.mubr.f32.mxu0 0.0
  %288 = vmatmul.mubr.f32.gmra.mrb[0].mxu0 %v210
  %v289 = vpop.f32.mrb[0].mxu0
  %v290 = vadd.f32 0.0, %v289
  %v291 = vpop.f32.mrb[0].mxu0
  %292 = vmatprep.mubr.f32.mxu0 0.0
  %293 = vmatmul.mubr.f32.gmra.mrb[0].mxu0 %v213
  %v294 = vpop.f32.mrb[0].mxu0
  %v295 = vadd.f32 0.0, %v294
  %v296 = vpop.f32.mrb[0].mxu0
  %297 = vmatprep.mubr.f32.mxu0 0.0
  %298 = vmatmul.mubr.f32.gmra.mrb[0].mxu0 %v216
  %v299 = vpop.f32.mrb[0].mxu0
  %v300 = vadd.f32 0.0, %v299
  %v301 = vpop.f32.mrb[0].mxu0
  %302 = vdwg.mxu0
  %v303 = vlaneseq
  %v304 = vshrl.u32 %v303, 7
  %v305 = vsub.s32 0, %v304
  %v306 = vrot.slane %v44, %v305
  %v307 = vadd.f32 %v188, %v306
  %v308 = vadd.f32 %v193, %v306
  %v309 = vadd.f32 %v198, %v306
  %v310 = vadd.f32 %v203, %v306
  %v311 = vadd.f32 %v285, %v306
  %v312 = vadd.f32 %v290, %v306
  %v313 = vadd.f32 %v295, %v306
  %v314 = vadd.f32 %v300, %v306
  %vm315 = vcmp.gt.f32.partialorder %v307, 0.0
  %vm316 = vcmp.gt.f32.partialorder %v308, 0.0
  %vm317 = vcmp.gt.f32.partialorder %v309, 0.0
  %vm318 = vcmp.gt.f32.partialorder %v310, 0.0
  %vm319 = vcmp.gt.f32.partialorder %v311, 0.0
  %vm320 = vcmp.gt.f32.partialorder %v312, 0.0
  %vm321 = vcmp.gt.f32.partialorder %v313, 0.0
  %vm322 = vcmp.gt.f32.partialorder %v314, 0.0
  %v323 = vmul.f32 %v307, 0.01
  %v324 = vmul.f32 %v308, 0.01
  %v325 = vmul.f32 %v309, 0.01
  %v326 = vmul.f32 %v310, 0.01
  %v327 = vmul.f32 %v311, 0.01
  %v328 = vmul.f32 %v312, 0.01
  %v329 = vmul.f32 %v313, 0.01
  %v330 = vmul.f32 %v314, 0.01
  %v331 = vsel %vm315, %v307, %v323
  %v332 = vsel %vm316, %v308, %v324
  %v333 = vsel %vm317, %v309, %v325
  %v334 = vsel %vm318, %v310, %v326
  %v335 = vsel %vm319, %v311, %v327
  %v336 = vsel %vm320, %v312, %v328
  %v337 = vsel %vm321, %v313, %v329
  %v338 = vsel %vm322, %v314, %v330
  %339 = vmatprep.subr.mxu0 0.0
  %340 = vmatpush1.msra.mxu0 %v331
  %341 = vmatprep.subr.mxu0 0.0
  %342 = vmatpush1.msra.mxu0 %v332
  %343 = vmatprep.subr.mxu0 0.0
  %344 = vmatpush1.msra.mxu0 %v333
  %345 = vmatprep.subr.mxu0 0.0
  %346 = vmatpush1.msra.mxu0 %v334
  %347 = vmatprep.subr.mxu0 0.0
  %348 = vmatpush1.msra.mxu0 0.0
  %349 = vmatprep.subr.mxu0 0.0
  %350 = vmatpush1.msra.mxu0 0.0
  %351 = vmatprep.subr.mxu0 0.0
  %352 = vmatpush1.msra.mxu0 0.0
  %353 = vmatprep.subr.mxu0 0.0
  %354 = vmatpush1.msra.mxu0 0.0
  %355 = vmatprep.subr.mxu0 0.0
  %356 = vmatpush1.msra.mxu0 0.0
  %357 = vmatprep.subr.mxu0 0.0
  %358 = vmatpush1.msra.mxu0 0.0
  %359 = vmatprep.subr.mxu0 0.0
  %360 = vmatpush1.msra.mxu0 0.0
  %361 = vmatprep.subr.mxu0 0.0
  %362 = vmatpush1.msra.mxu0 0.0
  %363 = vmatprep.subr.mxu0 0.0
  %364 = vmatpush1.msra.mxu0 0.0
  %365 = vmatprep.subr.mxu0 0.0
  %366 = vmatpush1.msra.mxu0 0.0
  %367 = vmatprep.subr.mxu0 0.0
  %368 = vmatpush1.msra.mxu0 0.0
  %369 = vmatprep.subr.mxu0 0.0
  %370 = vmatpush1.msra.mxu0 0.0
  %371 = vmatprep.subr.mxu0 0.0
  %372 = vmatpush1.msra.mxu0 0.0
  %373 = vmatprep.subr.mxu0 0.0
  %374 = vmatpush1.msra.mxu0 0.0
  %375 = vmatprep.subr.mxu0 0.0
  %376 = vmatpush1.msra.mxu0 0.0
  %377 = vmatprep.subr.mxu0 0.0
  %378 = vmatpush1.msra.mxu0 0.0
  %379 = vmatprep.subr.mxu0 0.0
  %380 = vmatpush1.msra.mxu0 0.0
  %381 = vmatprep.subr.mxu0 0.0
  %382 = vmatpush1.msra.mxu0 0.0
  %383 = vmatprep.subr.mxu0 0.0
  %384 = vmatpush1.msra.mxu0 0.0
  %385 = vmatprep.subr.mxu0 0.0
  %386 = vmatpush1.msra.mxu0 0.0
  %387 = vmatprep.subr.mxu0 0.0
  %388 = vmatpush1.msra.mxu0 0.0
  %389 = vmatprep.subr.mxu0 0.0
  %390 = vmatpush1.msra.mxu0 0.0
  %391 = vmatprep.subr.mxu0 0.0
  %392 = vmatpush1.msra.mxu0 0.0
  %393 = vmatprep.subr.mxu0 0.0
  %394 = vmatpush1.msra.mxu0 0.0
  %395 = vmatprep.subr.mxu0 0.0
  %396 = vmatpush1.msra.mxu0 0.0
  %397 = vmatprep.subr.mxu0 0.0
  %398 = vmatpush1.msra.mxu0 0.0
  %399 = vmatprep.subr.mxu0 0.0
  %400 = vmatpush1.msra.mxu0 0.0
  %401 = vmatprep.subr.mxu0 0.0
  %402 = vmatpush1.msra.mxu0 0.0
  %403 = vmatprep.mubr.f32.mxu0 0.0
  %404 = vmatmul.mubr.f32.gmra.mrb[0].mxu0 %v110
  %v405 = vpop.f32.mrb[0].mxu0
  %v406 = vadd.f32 0.0, %v405
  %v407 = vpop.f32.mrb[0].mxu0
  %408 = vmatprep.mubr.f32.mxu0 0.0
  %409 = vmatmul.mubr.f32.gmra.mrb[0].mxu0 %v113
  %v410 = vpop.f32.mrb[0].mxu0
  %v411 = vadd.f32 0.0, %v410
  %v412 = vpop.f32.mrb[0].mxu0
  %413 = vmatprep.mubr.f32.mxu0 0.0
  %414 = vmatmul.mubr.f32.gmra.mrb[0].mxu0 %v116
  %v415 = vpop.f32.mrb[0].mxu0
  %v416 = vadd.f32 0.0, %v415
  %v417 = vpop.f32.mrb[0].mxu0
  %418 = vmatprep.mubr.f32.mxu0 0.0
  %419 = vmatmul.mubr.f32.gmra.mrb[0].mxu0 %v119
  %v420 = vpop.f32.mrb[0].mxu0
  %v421 = vadd.f32 0.0, %v420
  %v422 = vpop.f32.mrb[0].mxu0
  %423 = vdwg.mxu0
  %424 = vmatprep.subr.mxu0 0.0
  %425 = vmatpush1.msra.mxu0 %v335
  %426 = vmatprep.subr.mxu0 0.0
  %427 = vmatpush1.msra.mxu0 %v336
  %428 = vmatprep.subr.mxu0 0.0
  %429 = vmatpush1.msra.mxu0 %v337
  %430 = vmatprep.subr.mxu0 0.0
  %431 = vmatpush1.msra.mxu0 %v338
  %432 = vmatprep.subr.mxu0 0.0
  %433 = vmatpush1.msra.mxu0 0.0
  %434 = vmatprep.subr.mxu0 0.0
  %435 = vmatpush1.msra.mxu0 0.0
  %436 = vmatprep.subr.mxu0 0.0
  %437 = vmatpush1.msra.mxu0 0.0
  %438 = vmatprep.subr.mxu0 0.0
  %439 = vmatpush1.msra.mxu0 0.0
  %440 = vmatprep.subr.mxu0 0.0
  %441 = vmatpush1.msra.mxu0 0.0
  %442 = vmatprep.subr.mxu0 0.0
  %443 = vmatpush1.msra.mxu0 0.0
  %444 = vmatprep.subr.mxu0 0.0
  %445 = vmatpush1.msra.mxu0 0.0
  %446 = vmatprep.subr.mxu0 0.0
  %447 = vmatpush1.msra.mxu0 0.0
  %448 = vmatprep.subr.mxu0 0.0
  %449 = vmatpush1.msra.mxu0 0.0
  %450 = vmatprep.subr.mxu0 0.0
  %451 = vmatpush1.msra.mxu0 0.0
  %452 = vmatprep.subr.mxu0 0.0
  %453 = vmatpush1.msra.mxu0 0.0
  %454 = vmatprep.subr.mxu0 0.0
  %455 = vmatpush1.msra.mxu0 0.0
  %456 = vmatprep.subr.mxu0 0.0
  %457 = vmatpush1.msra.mxu0 0.0
  %458 = vmatprep.subr.mxu0 0.0
  %459 = vmatpush1.msra.mxu0 0.0
  %460 = vmatprep.subr.mxu0 0.0
  %461 = vmatpush1.msra.mxu0 0.0
  %462 = vmatprep.subr.mxu0 0.0
  %463 = vmatpush1.msra.mxu0 0.0
  %464 = vmatprep.subr.mxu0 0.0
  %465 = vmatpush1.msra.mxu0 0.0
  %466 = vmatprep.subr.mxu0 0.0
  %467 = vmatpush1.msra.mxu0 0.0
  %468 = vmatprep.subr.mxu0 0.0
  %469 = vmatpush1.msra.mxu0 0.0
  %470 = vmatprep.subr.mxu0 0.0
  %471 = vmatpush1.msra.mxu0 0.0
  %472 = vmatprep.subr.mxu0 0.0
  %473 = vmatpush1.msra.mxu0 0.0
  %474 = vmatprep.subr.mxu0 0.0
  %475 = vmatpush1.msra.mxu0 0.0
  %476 = vmatprep.subr.mxu0 0.0
  %477 = vmatpush1.msra.mxu0 0.0
  %478 = vmatprep.subr.mxu0 0.0
  %479 = vmatpush1.msra.mxu0 0.0
  %480 = vmatprep.subr.mxu0 0.0
  %481 = vmatpush1.msra.mxu0 0.0
  %482 = vmatprep.subr.mxu0 0.0
  %483 = vmatpush1.msra.mxu0 0.0
  %484 = vmatprep.subr.mxu0 0.0
  %485 = vmatpush1.msra.mxu0 0.0
  %486 = vmatprep.subr.mxu0 0.0
  %487 = vmatpush1.msra.mxu0 0.0
  %488 = vmatprep.mubr.f32.mxu0 0.0
  %489 = vmatmul.mubr.f32.gmra.mrb[0].mxu0 %v207
  %v490 = vpop.f32.mrb[0].mxu0
  %v491 = vadd.f32 0.0, %v490
  %v492 = vpop.f32.mrb[0].mxu0
  %493 = vmatprep.mubr.f32.mxu0 0.0
  %494 = vmatmul.mubr.f32.gmra.mrb[0].mxu0 %v210
  %v495 = vpop.f32.mrb[0].mxu0
  %v496 = vadd.f32 0.0, %v495
  %v497 = vpop.f32.mrb[0].mxu0
  %498 = vmatprep.mubr.f32.mxu0 0.0
  %499 = vmatmul.mubr.f32.gmra.mrb[0].mxu0 %v213
  %v500 = vpop.f32.mrb[0].mxu0
  %v501 = vadd.f32 0.0, %v500
  %v502 = vpop.f32.mrb[0].mxu0
  %503 = vmatprep.mubr.f32.mxu0 0.0
  %504 = vmatmul.mubr.f32.gmra.mrb[0].mxu0 %v216
  %v505 = vpop.f32.mrb[0].mxu0
  %v506 = vadd.f32 0.0, %v505
  %v507 = vpop.f32.mrb[0].mxu0
  %508 = vdwg.mxu0
  %v509 = vlaneseq
  %v510 = vshrl.u32 %v509, 7
  %v511 = vsub.s32 0, %v510
  %v512 = vrot.slane %v45, %v511
  %v514 = vsel %vm108, %v406, 0
  %v517 = vsel %vm108, %v411, 0
  %v520 = vsel %vm108, %v416, 0
  %v523 = vsel %vm108, %v421, 0
  %v526 = vsel %vm108, %v491, 0
  %v529 = vsel %vm108, %v496, 0
  %v532 = vsel %vm108, %v501, 0
  %v535 = vsel %vm108, %v506, 0
  %537 = vmatprep.subr.mxu0 0.0
  %538 = vmatpush1.msra.mxu0 %v48
  %539 = vmatprep.subr.mxu0 0.0
  %540 = vmatpush1.msra.mxu0 %v49
  %541 = vmatprep.subr.mxu0 0.0
  %542 = vmatpush1.msra.mxu0 %v50
  %543 = vmatprep.subr.mxu0 0.0
  %544 = vmatpush1.msra.mxu0 %v51
  %545 = vmatprep.subr.mxu0 0.0
  %546 = vmatpush1.msra.mxu0 0.0
  %547 = vmatprep.subr.mxu0 0.0
  %548 = vmatpush1.msra.mxu0 0.0
  %549 = vmatprep.subr.mxu0 0.0
  %550 = vmatpush1.msra.mxu0 0.0
  %551 = vmatprep.subr.mxu0 0.0
  %552 = vmatpush1.msra.mxu0 0.0
  %553 = vmatprep.subr.mxu0 0.0
  %554 = vmatpush1.msra.mxu0 0.0
  %555 = vmatprep.subr.mxu0 0.0
  %556 = vmatpush1.msra.mxu0 0.0
  %557 = vmatprep.subr.mxu0 0.0
  %558 = vmatpush1.msra.mxu0 0.0
  %559 = vmatprep.subr.mxu0 0.0
  %560 = vmatpush1.msra.mxu0 0.0
  %561 = vmatprep.subr.mxu0 0.0
  %562 = vmatpush1.msra.mxu0 0.0
  %563 = vmatprep.subr.mxu0 0.0
  %564 = vmatpush1.msra.mxu0 0.0
  %565 = vmatprep.subr.mxu0 0.0
  %566 = vmatpush1.msra.mxu0 0.0
  %567 = vmatprep.subr.mxu0 0.0
  %568 = vmatpush1.msra.mxu0 0.0
  %569 = vmatprep.subr.mxu0 0.0
  %570 = vmatpush1.msra.mxu0 0.0
  %571 = vmatprep.subr.mxu0 0.0
  %572 = vmatpush1.msra.mxu0 0.0
  %573 = vmatprep.subr.mxu0 0.0
  %574 = vmatpush1.msra.mxu0 0.0
  %575 = vmatprep.subr.mxu0 0.0
  %576 = vmatpush1.msra.mxu0 0.0
  %577 = vmatprep.subr.mxu0 0.0
  %578 = vmatpush1.msra.mxu0 0.0
  %579 = vmatprep.subr.mxu0 0.0
  %580 = vmatpush1.msra.mxu0 0.0
  %581 = vmatprep.subr.mxu0 0.0
  %582 = vmatpush1.msra.mxu0 0.0
  %583 = vmatprep.subr.mxu0 0.0
  %584 = vmatpush1.msra.mxu0 0.0
  %585 = vmatprep.subr.mxu0 0.0
  %586 = vmatpush1.msra.mxu0 0.0
  %587 = vmatprep.subr.mxu0 0.0
  %588 = vmatpush1.msra.mxu0 0.0
  %589 = vmatprep.subr.mxu0 0.0
  %590 = vmatpush1.msra.mxu0 0.0
  %591 = vmatprep.subr.mxu0 0.0
  %592 = vmatpush1.msra.mxu0 0.0
  %593 = vmatprep.subr.mxu0 0.0
  %594 = vmatpush1.msra.mxu0 0.0
  %595 = vmatprep.subr.mxu0 0.0
  %596 = vmatpush1.msra.mxu0 0.0
  %597 = vmatprep.subr.mxu0 0.0
  %598 = vmatpush1.msra.mxu0 0.0
  %599 = vmatprep.subr.mxu0 0.0
  %600 = vmatpush1.msra.mxu0 0.0
  %601 = vmatprep.mubr.f32.mxu0 0.0
  %602 = vmatmul.mubr.f32.gmra.mrb[0].mxu0 %v514
  %v603 = vpop.f32.mrb[0].mxu0
  %v604 = vadd.f32 %v512, %v603
  %v605 = vpop.f32.mrb[0].mxu0
  %606 = vmatprep.mubr.f32.mxu0 0.0
  %607 = vmatmul.mubr.f32.gmra.mrb[0].mxu0 %v517
  %v608 = vpop.f32.mrb[0].mxu0
  %v609 = vadd.f32 %v512, %v608
  %v610 = vpop.f32.mrb[0].mxu0
  %611 = vmatprep.mubr.f32.mxu0 0.0
  %612 = vmatmul.mubr.f32.gmra.mrb[0].mxu0 %v520
  %v613 = vpop.f32.mrb[0].mxu0
  %v614 = vadd.f32 %v512, %v613
  %v615 = vpop.f32.mrb[0].mxu0
  %616 = vmatprep.mubr.f32.mxu0 0.0
  %617 = vmatmul.mubr.f32.gmra.mrb[0].mxu0 %v523
  %v618 = vpop.f32.mrb[0].mxu0
  %v619 = vadd.f32 %v512, %v618
  %v620 = vpop.f32.mrb[0].mxu0
  %621 = vmatprep.mubr.f32.mxu0 0.0
  %622 = vmatmul.mubr.f32.gmra.mrb[0].mxu0 %v526
  %v623 = vpop.f32.mrb[0].mxu0
  %v624 = vadd.f32 %v512, %v623
  %v625 = vpop.f32.mrb[0].mxu0
  %626 = vmatprep.mubr.f32.mxu0 0.0
  %627 = vmatmul.mubr.f32.gmra.mrb[0].mxu0 %v529
  %v628 = vpop.f32.mrb[0].mxu0
  %v629 = vadd.f32 %v512, %v628
  %v630 = vpop.f32.mrb[0].mxu0
  %631 = vmatprep.mubr.f32.mxu0 0.0
  %632 = vmatmul.mubr.f32.gmra.mrb[0].mxu0 %v532
  %v633 = vpop.f32.mrb[0].mxu0
  %v634 = vadd.f32 %v512, %v633
  %v635 = vpop.f32.mrb[0].mxu0
  %636 = vmatprep.mubr.f32.mxu0 0.0
  %637 = vmatmul.mubr.f32.gmra.mrb[0].mxu0 %v535
  %v638 = vpop.f32.mrb[0].mxu0
  %v639 = vadd.f32 %v512, %v638
  %v640 = vpop.f32.mrb[0].mxu0
  %641 = vdwg.mxu0
  %642 = vmatprep.subr.mxu0 0.0
  %643 = vmatpush1.msra.mxu0 %v604
  %644 = vmatprep.subr.mxu0 0.0
  %645 = vmatpush1.msra.mxu0 %v609
  %646 = vmatprep.subr.mxu0 0.0
  %647 = vmatpush1.msra.mxu0 %v614
  %648 = vmatprep.subr.mxu0 0.0
  %649 = vmatpush1.msra.mxu0 %v619
  %650 = vmatprep.subr.mxu0 0.0
  %651 = vmatpush1.msra.mxu0 0.0
  %652 = vmatprep.subr.mxu0 0.0
  %653 = vmatpush1.msra.mxu0 0.0
  %654 = vmatprep.subr.mxu0 0.0
  %655 = vmatpush1.msra.mxu0 0.0
  %656 = vmatprep.subr.mxu0 0.0
  %657 = vmatpush1.msra.mxu0 0.0
  %658 = vmatprep.subr.mxu0 0.0
  %659 = vmatpush1.msra.mxu0 0.0
  %660 = vmatprep.subr.mxu0 0.0
  %661 = vmatpush1.msra.mxu0 0.0
  %662 = vmatprep.subr.mxu0 0.0
  %663 = vmatpush1.msra.mxu0 0.0
  %664 = vmatprep.subr.mxu0 0.0
  %665 = vmatpush1.msra.mxu0 0.0
  %666 = vmatprep.subr.mxu0 0.0
  %667 = vmatpush1.msra.mxu0 0.0
  %668 = vmatprep.subr.mxu0 0.0
  %669 = vmatpush1.msra.mxu0 0.0
  %670 = vmatprep.subr.mxu0 0.0
  %671 = vmatpush1.msra.mxu0 0.0
  %672 = vmatprep.subr.mxu0 0.0
  %673 = vmatpush1.msra.mxu0 0.0
  %674 = vmatprep.subr.mxu0 0.0
  %675 = vmatpush1.msra.mxu0 0.0
  %676 = vmatprep.subr.mxu0 0.0
  %677 = vmatpush1.msra.mxu0 0.0
  %678 = vmatprep.subr.mxu0 0.0
  %679 = vmatpush1.msra.mxu0 0.0
  %680 = vmatprep.subr.mxu0 0.0
  %681 = vmatpush1.msra.mxu0 0.0
  %682 = vmatprep.subr.mxu0 0.0
  %683 = vmatpush1.msra.mxu0 0.0
  %684 = vmatprep.subr.mxu0 0.0
  %685 = vmatpush1.msra.mxu0 0.0
  %686 = vmatprep.subr.mxu0 0.0
  %687 = vmatpush1.msra.mxu0 0.0
  %688 = vmatprep.subr.mxu0 0.0
  %689 = vmatpush1.msra.mxu0 0.0
  %690 = vmatprep.subr.mxu0 0.0
  %691 = vmatpush1.msra.mxu0 0.0
  %692 = vmatprep.subr.mxu0 0.0
  %693 = vmatpush1.msra.mxu0 0.0
  %694 = vmatprep.subr.mxu0 0.0
  %695 = vmatpush1.msra.mxu0 0.0
  %696 = vmatprep.subr.mxu0 0.0
  %697 = vmatpush1.msra.mxu0 0.0
  %698 = vmatprep.subr.mxu0 0.0
  %699 = vmatpush1.msra.mxu0 0.0
  %700 = vmatprep.subr.mxu0 0.0
  %701 = vmatpush1.msra.mxu0 0.0
  %702 = vmatprep.subr.mxu0 0.0
  %703 = vmatpush1.msra.mxu0 0.0
  %704 = vmatprep.subr.mxu0 0.0
  %705 = vmatpush1.msra.mxu0 0.0
  %706 = vmatprep.mubr.f32.mxu0 0.0
  %707 = vmatmul.mubr.f32.gmra.mrb[0].mxu0 %v110
  %v708 = vpop.f32.mrb[0].mxu0
  %v709 = vadd.f32 0.0, %v708
  %v710 = vpop.f32.mrb[0].mxu0
  %711 = vmatprep.mubr.f32.mxu0 0.0
  %712 = vmatmul.mubr.f32.gmra.mrb[0].mxu0 %v113
  %v713 = vpop.f32.mrb[0].mxu0
  %v714 = vadd.f32 0.0, %v713
  %v715 = vpop.f32.mrb[0].mxu0
  %716 = vmatprep.mubr.f32.mxu0 0.0
  %717 = vmatmul.mubr.f32.gmra.mrb[0].mxu0 %v116
  %v718 = vpop.f32.mrb[0].mxu0
  %v719 = vadd.f32 0.0, %v718
  %v720 = vpop.f32.mrb[0].mxu0
  %721 = vmatprep.mubr.f32.mxu0 0.0
  %722 = vmatmul.mubr.f32.gmra.mrb[0].mxu0 %v119
  %v723 = vpop.f32.mrb[0].mxu0
  %v724 = vadd.f32 0.0, %v723
  %v725 = vpop.f32.mrb[0].mxu0
  %726 = vdwg.mxu0
  %727 = vmatprep.subr.mxu0 0.0
  %728 = vmatpush1.msra.mxu0 %v624
  %729 = vmatprep.subr.mxu0 0.0
  %730 = vmatpush1.msra.mxu0 %v629
  %731 = vmatprep.subr.mxu0 0.0
  %732 = vmatpush1.msra.mxu0 %v634
  %733 = vmatprep.subr.mxu0 0.0
  %734 = vmatpush1.msra.mxu0 %v639
  %735 = vmatprep.subr.mxu0 0.0
  %736 = vmatpush1.msra.mxu0 0.0
  %737 = vmatprep.subr.mxu0 0.0
  %738 = vmatpush1.msra.mxu0 0.0
  %739 = vmatprep.subr.mxu0 0.0
  %740 = vmatpush1.msra.mxu0 0.0
  %741 = vmatprep.subr.mxu0 0.0
  %742 = vmatpush1.msra.mxu0 0.0
  %743 = vmatprep.subr.mxu0 0.0
  %744 = vmatpush1.msra.mxu0 0.0
  %745 = vmatprep.subr.mxu0 0.0
  %746 = vmatpush1.msra.mxu0 0.0
  %747 = vmatprep.subr.mxu0 0.0
  %748 = vmatpush1.msra.mxu0 0.0
  %749 = vmatprep.subr.mxu0 0.0
  %750 = vmatpush1.msra.mxu0 0.0
  %751 = vmatprep.subr.mxu0 0.0
  %752 = vmatpush1.msra.mxu0 0.0
  %753 = vmatprep.subr.mxu0 0.0
  %754 = vmatpush1.msra.mxu0 0.0
  %755 = vmatprep.subr.mxu0 0.0
  %756 = vmatpush1.msra.mxu0 0.0
  %757 = vmatprep.subr.mxu0 0.0
  %758 = vmatpush1.msra.mxu0 0.0
  %759 = vmatprep.subr.mxu0 0.0
  %760 = vmatpush1.msra.mxu0 0.0
  %761 = vmatprep.subr.mxu0 0.0
  %762 = vmatpush1.msra.mxu0 0.0
  %763 = vmatprep.subr.mxu0 0.0
  %764 = vmatpush1.msra.mxu0 0.0
  %765 = vmatprep.subr.mxu0 0.0
  %766 = vmatpush1.msra.mxu0 0.0
  %767 = vmatprep.subr.mxu0 0.0
  %768 = vmatpush1.msra.mxu0 0.0
  %769 = vmatprep.subr.mxu0 0.0
  %770 = vmatpush1.msra.mxu0 0.0
  %771 = vmatprep.subr.mxu0 0.0
  %772 = vmatpush1.msra.mxu0 0.0
  %773 = vmatprep.subr.mxu0 0.0
  %774 = vmatpush1.msra.mxu0 0.0
  %775 = vmatprep.subr.mxu0 0.0
  %776 = vmatpush1.msra.mxu0 0.0
  %777 = vmatprep.subr.mxu0 0.0
  %778 = vmatpush1.msra.mxu0 0.0
  %779 = vmatprep.subr.mxu0 0.0
  %780 = vmatpush1.msra.mxu0 0.0
  %781 = vmatprep.subr.mxu0 0.0
  %782 = vmatpush1.msra.mxu0 0.0
  %783 = vmatprep.subr.mxu0 0.0
  %784 = vmatpush1.msra.mxu0 0.0
  %785 = vmatprep.subr.mxu0 0.0
  %786 = vmatpush1.msra.mxu0 0.0
  %787 = vmatprep.subr.mxu0 0.0
  %788 = vmatpush1.msra.mxu0 0.0
  %789 = vmatprep.subr.mxu0 0.0
  %790 = vmatpush1.msra.mxu0 0.0
  %791 = vmatprep.mubr.f32.mxu0 0.0
  %792 = vmatmul.mubr.f32.gmra.mrb[0].mxu0 %v207
  %v793 = vpop.f32.mrb[0].mxu0
  %v794 = vadd.f32 0.0, %v793
  %v795 = vpop.f32.mrb[0].mxu0
  %796 = vmatprep.mubr.f32.mxu0 0.0
  %797 = vmatmul.mubr.f32.gmra.mrb[0].mxu0 %v210
  %v798 = vpop.f32.mrb[0].mxu0
  %v799 = vadd.f32 0.0, %v798
  %v800 = vpop.f32.mrb[0].mxu0
  %801 = vmatprep.mubr.f32.mxu0 0.0
  %802 = vmatmul.mubr.f32.gmra.mrb[0].mxu0 %v213
  %v803 = vpop.f32.mrb[0].mxu0
  %v804 = vadd.f32 0.0, %v803
  %v805 = vpop.f32.mrb[0].mxu0
  %806 = vmatprep.mubr.f32.mxu0 0.0
  %807 = vmatmul.mubr.f32.gmra.mrb[0].mxu0 %v216
  %v808 = vpop.f32.mrb[0].mxu0
  %v809 = vadd.f32 0.0, %v808
  %v810 = vpop.f32.mrb[0].mxu0
  %811 = vdwg.mxu0
  %812 = vset.pattern.permute.xlu0 1
  %813 = vperm.xlu0 %812, %v35
  %v814 = vpop.permute.xlu0 %813
  %816 = vset.pattern.permute.xlu0 1
  %817 = vperm.xlu0 %816, %v36
  %v818 = vpop.permute.xlu0 %817
  %820 = vset.pattern.permute.xlu0 1
  %821 = vperm.xlu0 %820, %v37
  %v822 = vpop.permute.xlu0 %821
  %824 = vset.pattern.permute.xlu0 1
  %825 = vperm.xlu0 %824, %v38
  %v826 = vpop.permute.xlu0 %825
  %828 = vset.pattern.permute.xlu0 1
  %829 = vperm.xlu0 %828, %v39
  %v830 = vpop.permute.xlu0 %829
  %832 = vset.pattern.permute.xlu0 1
  %833 = vperm.xlu0 %832, %v40
  %v834 = vpop.permute.xlu0 %833
  %836 = vset.pattern.permute.xlu0 1
  %837 = vperm.xlu0 %836, %v41
  %v838 = vpop.permute.xlu0 %837
  %840 = vset.pattern.permute.xlu0 1
  %841 = vperm.xlu0 %840, %v42
  %v842 = vpop.permute.xlu0 %841
  %v844 = vmul.f32 %v814, %v709
  %v845 = vmul.f32 %v818, %v714
  %v846 = vmul.f32 %v822, %v719
  %v847 = vmul.f32 %v826, %v724
  %v848 = vmul.f32 %v830, %v794
  %v849 = vmul.f32 %v834, %v799
  %v850 = vmul.f32 %v838, %v804
  %v851 = vmul.f32 %v842, %v809
  %v853 = vsel %vm108, %v844, 0
  %v856 = vsel %vm108, %v845, 0
  %v859 = vsel %vm108, %v846, 0
  %v862 = vsel %vm108, %v847, 0
  %v865 = vsel %vm108, %v848, 0
  %v868 = vsel %vm108, %v849, 0
  %v871 = vsel %vm108, %v850, 0
  %v874 = vsel %vm108, %v851, 0
  %876 = vmatprep.subr.mxu0 0.0
  %877 = vmatpush1.msra.mxu0 %v52
  %878 = vmatprep.subr.mxu0 0.0
  %879 = vmatpush1.msra.mxu0 %v53
  %880 = vmatprep.subr.mxu0 0.0
  %881 = vmatpush1.msra.mxu0 %v54
  %882 = vmatprep.subr.mxu0 0.0
  %883 = vmatpush1.msra.mxu0 %v55
  %884 = vmatprep.subr.mxu0 0.0
  %885 = vmatpush1.msra.mxu0 0.0
  %886 = vmatprep.subr.mxu0 0.0
  %887 = vmatpush1.msra.mxu0 0.0
  %888 = vmatprep.subr.mxu0 0.0
  %889 = vmatpush1.msra.mxu0 0.0
  %890 = vmatprep.subr.mxu0 0.0
  %891 = vmatpush1.msra.mxu0 0.0
  %892 = vmatprep.subr.mxu0 0.0
  %893 = vmatpush1.msra.mxu0 0.0
  %894 = vmatprep.subr.mxu0 0.0
  %895 = vmatpush1.msra.mxu0 0.0
  %896 = vmatprep.subr.mxu0 0.0
  %897 = vmatpush1.msra.mxu0 0.0
  %898 = vmatprep.subr.mxu0 0.0
  %899 = vmatpush1.msra.mxu0 0.0
  %900 = vmatprep.subr.mxu0 0.0
  %901 = vmatpush1.msra.mxu0 0.0
  %902 = vmatprep.subr.mxu0 0.0
  %903 = vmatpush1.msra.mxu0 0.0
  %904 = vmatprep.subr.mxu0 0.0
  %905 = vmatpush1.msra.mxu0 0.0
  %906 = vmatprep.subr.mxu0 0.0
  %907 = vmatpush1.msra.mxu0 0.0
  %908 = vmatprep.subr.mxu0 0.0
  %909 = vmatpush1.msra.mxu0 0.0
  %910 = vmatprep.subr.mxu0 0.0
  %911 = vmatpush1.msra.mxu0 0.0
  %912 = vmatprep.subr.mxu0 0.0
  %913 = vmatpush1.msra.mxu0 0.0
  %914 = vmatprep.subr.mxu0 0.0
  %915 = vmatpush1.msra.mxu0 0.0
  %916 = vmatprep.subr.mxu0 0.0
  %917 = vmatpush1.msra.mxu0 0.0
  %918 = vmatprep.subr.mxu0 0.0
  %919 = vmatpush1.msra.mxu0 0.0
  %920 = vmatprep.subr.mxu0 0.0
  %921 = vmatpush1.msra.mxu0 0.0
  %922 = vmatprep.subr.mxu0 0.0
  %923 = vmatpush1.msra.mxu0 0.0
  %924 = vmatprep.subr.mxu0 0.0
  %925 = vmatpush1.msra.mxu0 0.0
  %926 = vmatprep.subr.mxu0 0.0
  %927 = vmatpush1.msra.mxu0 0.0
  %928 = vmatprep.subr.mxu0 0.0
  %929 = vmatpush1.msra.mxu0 0.0
  %930 = vmatprep.subr.mxu0 0.0
  %931 = vmatpush1.msra.mxu0 0.0
  %932 = vmatprep.subr.mxu0 0.0
  %933 = vmatpush1.msra.mxu0 0.0
  %934 = vmatprep.subr.mxu0 0.0
  %935 = vmatpush1.msra.mxu0 0.0
  %936 = vmatprep.subr.mxu0 0.0
  %937 = vmatpush1.msra.mxu0 0.0
  %938 = vmatprep.subr.mxu0 0.0
  %939 = vmatpush1.msra.mxu0 0.0
  %940 = vmatprep.mubr.f32.mxu0 0.0
  %941 = vmatmul.mubr.f32.gmra.mrb[0].mxu0 %v853
  %v942 = vpop.f32.mrb[0].mxu0
  %v943 = vadd.f32 0.0, %v942
  %v944 = vpop.f32.mrb[0].mxu0
  %945 = vmatprep.mubr.f32.mxu0 0.0
  %946 = vmatmul.mubr.f32.gmra.mrb[0].mxu0 %v856
  %v947 = vpop.f32.mrb[0].mxu0
  %v948 = vadd.f32 0.0, %v947
  %v949 = vpop.f32.mrb[0].mxu0
  %950 = vmatprep.mubr.f32.mxu0 0.0
  %951 = vmatmul.mubr.f32.gmra.mrb[0].mxu0 %v859
  %v952 = vpop.f32.mrb[0].mxu0
  %v953 = vadd.f32 0.0, %v952
  %v954 = vpop.f32.mrb[0].mxu0
  %955 = vmatprep.mubr.f32.mxu0 0.0
  %956 = vmatmul.mubr.f32.gmra.mrb[0].mxu0 %v862
  %v957 = vpop.f32.mrb[0].mxu0
  %v958 = vadd.f32 0.0, %v957
  %v959 = vpop.f32.mrb[0].mxu0
  %960 = vmatprep.mubr.f32.mxu0 0.0
  %961 = vmatmul.mubr.f32.gmra.mrb[0].mxu0 %v865
  %v962 = vpop.f32.mrb[0].mxu0
  %v963 = vadd.f32 0.0, %v962
  %v964 = vpop.f32.mrb[0].mxu0
  %965 = vmatprep.mubr.f32.mxu0 0.0
  %966 = vmatmul.mubr.f32.gmra.mrb[0].mxu0 %v868
  %v967 = vpop.f32.mrb[0].mxu0
  %v968 = vadd.f32 0.0, %v967
  %v969 = vpop.f32.mrb[0].mxu0
  %970 = vmatprep.mubr.f32.mxu0 0.0
  %971 = vmatmul.mubr.f32.gmra.mrb[0].mxu0 %v871
  %v972 = vpop.f32.mrb[0].mxu0
  %v973 = vadd.f32 0.0, %v972
  %v974 = vpop.f32.mrb[0].mxu0
  %975 = vmatprep.mubr.f32.mxu0 0.0
  %976 = vmatmul.mubr.f32.gmra.mrb[0].mxu0 %v874
  %v977 = vpop.f32.mrb[0].mxu0
  %v978 = vadd.f32 0.0, %v977
  %v979 = vpop.f32.mrb[0].mxu0
  %980 = vdwg.mxu0
  %vm981 = vcmp.gt.f32.partialorder %v943, 0.0
  %vm982 = vcmp.gt.f32.partialorder %v948, 0.0
  %vm983 = vcmp.gt.f32.partialorder %v953, 0.0
  %vm984 = vcmp.gt.f32.partialorder %v958, 0.0
  %vm985 = vcmp.gt.f32.partialorder %v963, 0.0
  %vm986 = vcmp.gt.f32.partialorder %v968, 0.0
  %vm987 = vcmp.gt.f32.partialorder %v973, 0.0
  %vm988 = vcmp.gt.f32.partialorder %v978, 0.0
  %v989 = vmul.f32 %v943, 0.01
  %v990 = vmul.f32 %v948, 0.01
  %v991 = vmul.f32 %v953, 0.01
  %v992 = vmul.f32 %v958, 0.01
  %v993 = vmul.f32 %v963, 0.01
  %v994 = vmul.f32 %v968, 0.01
  %v995 = vmul.f32 %v973, 0.01
  %v996 = vmul.f32 %v978, 0.01
  %v997 = vsel %vm981, %v943, %v989
  %v998 = vsel %vm982, %v948, %v990
  %v999 = vsel %vm983, %v953, %v991
  %v1000 = vsel %vm984, %v958, %v992
  %v1001 = vsel %vm985, %v963, %v993
  %v1002 = vsel %vm986, %v968, %v994
  %v1003 = vsel %vm987, %v973, %v995
  %v1004 = vsel %vm988, %v978, %v996
  %1005 = vset.pattern.permute.xlu0 2
  %1006 = vperm.xlu0 %1005, %v35
  %v1007 = vpop.permute.xlu0 %1006
  %1009 = vset.pattern.permute.xlu0 2
  %1010 = vperm.xlu0 %1009, %v36
  %v1011 = vpop.permute.xlu0 %1010
  %1013 = vset.pattern.permute.xlu0 2
  %1014 = vperm.xlu0 %1013, %v37
  %v1015 = vpop.permute.xlu0 %1014
  %1017 = vset.pattern.permute.xlu0 2
  %1018 = vperm.xlu0 %1017, %v38
  %v1019 = vpop.permute.xlu0 %1018
  %1021 = vset.pattern.permute.xlu0 2
  %1022 = vperm.xlu0 %1021, %v39
  %v1023 = vpop.permute.xlu0 %1022
  %1025 = vset.pattern.permute.xlu0 2
  %1026 = vperm.xlu0 %1025, %v40
  %v1027 = vpop.permute.xlu0 %1026
  %1029 = vset.pattern.permute.xlu0 2
  %1030 = vperm.xlu0 %1029, %v41
  %v1031 = vpop.permute.xlu0 %1030
  %1033 = vset.pattern.permute.xlu0 2
  %1034 = vperm.xlu0 %1033, %v42
  %v1035 = vpop.permute.xlu0 %1034
  %v1037 = vmul.f32 %v1007, %v997
  %v1038 = vmul.f32 %v1011, %v998
  %v1039 = vmul.f32 %v1015, %v999
  %v1040 = vmul.f32 %v1019, %v1000
  %v1041 = vmul.f32 %v1023, %v1001
  %v1042 = vmul.f32 %v1027, %v1002
  %v1043 = vmul.f32 %v1031, %v1003
  %v1044 = vmul.f32 %v1035, %v1004
  %v1045 = vsel %vm108, %v1037, 0.0
  %v1046 = vsel %vm108, %v1038, 0.0
  %v1047 = vadd.f32 %v1045, %v1046
  %v1048 = vsel %vm108, %v1039, 0.0
  %v1049 = vadd.f32 %v1047, %v1048
  %v1050 = vsel %vm108, %v1040, 0.0
  %v1051 = vadd.f32 %v1049, %v1050
  %v1052 = vrot.slane %v1051, 4
  %v1053 = vadd.f32 %v1051, %v1052
  %v1054 = vrot.slane %v1053, 2
  %v1055 = vadd.f32 %v1053, %v1054
  %v1056 = vrot.slane %v1055, 1
  %v1057 = vadd.f32 %v1055, %v1056
  %v1058 = vsel %vm108, %v1041, 0.0
  %v1059 = vsel %vm108, %v1042, 0.0
  %v1060 = vadd.f32 %v1058, %v1059
  %v1061 = vsel %vm108, %v1043, 0.0
  %v1062 = vadd.f32 %v1060, %v1061
  %v1063 = vsel %vm108, %v1044, 0.0
  %v1064 = vadd.f32 %v1062, %v1063
  %v1065 = vrot.slane %v1064, 4
  %v1066 = vadd.f32 %v1064, %v1065
  %v1067 = vrot.slane %v1066, 2
  %v1068 = vadd.f32 %v1066, %v1067
  %v1069 = vrot.slane %v1068, 1
  %v1070 = vadd.f32 %v1068, %v1069
  %v1071 = vlaneseq
  %v1072 = vshrl.u32 %v1071, 7
  %v1073 = vsub.s32 0, %v1072
  %v1074 = vrot.slane %v46, %v1073
  %v1075 = vmul.f32 %v1057, %v1074
  %v1076 = vmul.f32 %v1070, %v1074
  %v1079 = vrot.slane %v1076, 7
  %vm1080 = vcmask 1041409
  %v1081 = vsel %vm1080, %v1079, %v1075
  %vm1083 = vcmask 254976
  %v1084 = vsel %vm1083, %v1081, 0.0
  %1085 = vadd.xlane.f32.xlu0 %v1084
  %v1086 = vpop.xlane.xlu0 %1085
  %v1087 = vlaneseq
  %v1088 = vshrl.u32 %v1087, 7
  %v1089 = vsub.s32 0, %v1088
  %v1090 = vrot.slane %v47, %v1089
  %v1091 = vadd.f32 %v1086, %v1090
  %vm1092 = vcmask 1024
  %1093 = vst.msk [vmem:[%s4] sm:$0x3] %vm1092, %v1091
  // Predicated region
  $region18: #{tpu_custom_call.1} parent=0 // pred_check
    _
  $region19: #{tpu_custom_call.1} parent=0 // pred_check_branch
    %1095 = sbr.rel (0) target = $region21
  $region20: #{tpu_custom_call.1} parent=0 // pred_region
    _
  $region21: #{tpu_custom_call.1} parent=0 // pred_fallthru
    _
  // Predicated region
  $region22: #{tpu_custom_call.1} parent=0 // pred_check
    _
  $region23: #{tpu_custom_call.1} parent=0 // pred_check_branch
    %1097 = sbr.rel (0) target = $region25
  $region24: #{tpu_custom_call.1} parent=0 // pred_region
    _
  $region25: #{tpu_custom_call.1} parent=0 // pred_fallthru
    _

</llo_original>
